<compile_context>
chip_gen: v7x
topology: tpu7x:2x2x1
jax: 0.10.0
libtpu: 0.0.40
codegen_flags: <defaults>
</compile_context>

<pallas_src>
import jax
import jax.numpy as jnp
from jax.experimental import pallas as pl
from jax.experimental.pallas import tpu as pltpu


def _rotary_kernel(cos_ref, sin_ref, x_ref, o_ref):
    # x_ref / o_ref: (1, tT, H, D).  cos_ref / sin_ref: (tT, D) f32 doubled
    # tables (cos_dup = [cos, cos], sin_signed = [sin, -sin]).
    x = x_ref[...]
    c = cos_ref[...][None, :, None, :]   # (1, tT, 1, D) f32, broadcast over heads
    s = sin_ref[...][None, :, None, :]
    D = x_ref.shape[-1]
    half = D // 2

    if D % 128 == 0:
        # Lane-dense fast path: single full-width unmasked store.
        # bf16 x promotes to f32 against the f32 tables (matches PyTorch fp32
        # cos/sin buffers), result cast back to x.dtype on the store.
        x_rot = pltpu.roll(x, shift=half, axis=x.ndim - 1)
        o_ref[...] = (x * c + x_rot * s).astype(o_ref.dtype)
    else:
        # Unaligned / tiny head dims: static half split, two stores, no
        # concatenate copy.
        # TODO(synk): for production D=64 pack two heads per 128-lane slab in
        # the wrapper instead of taking this masked-store path.
        x1 = x[..., :half]
        x2 = x[..., half:]
        o_ref[..., :half] = (x1 * c[..., :half] + x2 * s[..., :half]).astype(o_ref.dtype)
        # s[..., half:] == -sin  ->  x2*cos - x1*sin
        o_ref[..., half:] = (x2 * c[..., half:] + x1 * s[..., half:]).astype(o_ref.dtype)


def _choose_seq_tile(T, H, D, itemsize,
                     target_bytes=4 << 20,     # ~4 MiB x blocks
                     vmem_budget=24 << 20):    # headroom under 32 MiB scoped VMEM
    """Pick the T-tile for the (1, tT, H, D) x blocks.

    Targets ~4 MiB per x block (per-grid-step overhead amortization), then
    clamps so double-buffered input + output x blocks plus the (tT, D) f32
    table blocks fit in `vmem_budget`, then rounds to the dtype-aware sublane
    quantum.
    """
    bytes_per_t_x = H * D * itemsize
    bytes_per_t_tab = 2 * D * 4                    # cos + sin rows, f32
    per_t_live = 4 * bytes_per_t_x + 2 * bytes_per_t_tab  # 2-buf in + 2-buf out + 2-buf tables

    tT = max(1, target_bytes // bytes_per_t_x)
    tT = min(tT, max(1, vmem_budget // per_t_live))
    if tT >= T:
        return T
    sub = {4: 8, 2: 16, 1: 32}.get(itemsize, 8)    # sublane quantum of x dtype
    tT = max(sub, (tT // sub) * sub)
    return min(tT, T)


class Rotary:
    """JAX/Pallas port of the PyTorch `Rotary` module."""

    def __init__(self, n_embd, n_head, base=10000):
        assert n_embd % n_head == 0, (
            f"n_embd {n_embd} must be divisible by n_head {n_head}")
        head_dim = n_embd // n_head
        assert head_dim % 2 == 0, (
            f"head_dim {head_dim} must be divisible by 2")
        self.head_dim = head_dim
        # Same formula as the PyTorch register_buffer.
        self.inv_freq = (1.0 / base) ** (
            jnp.arange(0, head_dim, 2, dtype=jnp.float32) / head_dim)
        # Table cache (mirrors cos_cached / sin_cached / seq_len_cached).
        self._cached_T = None
        self._cos_dup = None
        self._sin_signed = None

    def _tables(self, T):
        # Tables stay float32 (PyTorch keeps fp32 buffers).  Table bytes are
        # 2*T*D*4 — tiny, and with the (T_tiles, B) grid they are fetched
        # once per T-tile regardless of batch size.
        if self._cached_T != T:
            t = jnp.arange(T, dtype=jnp.float32)
            freqs = jnp.outer(t, self.inv_freq)              # (T, D//2)
            cos = jnp.cos(freqs)
            sin = jnp.sin(freqs)
            self._cos_dup = jnp.concatenate([cos, cos], axis=-1)
            self._sin_signed = jnp.concatenate([sin, -sin], axis=-1)
            self._cached_T = T
        return self._cos_dup, self._sin_signed

    def __call__(self, x, *, donate_x=False):
        B, T, H, D = x.shape
        assert D == self.head_dim

        cos_dup, sin_signed = self._tables(T)

        tT = _choose_seq_tile(T, H, D, x.dtype.itemsize)
        nT = pl.cdiv(T, tT)
        # T-tile axis leads: long axis first for balanced v7x 2-TC sharding,
        # and with b innermost the table block index is constant across
        # consecutive steps (Pallas skips re-DMA of cos/sin per batch elem).
        grid = (nT, B)

        kwargs = {}
        if donate_x:
            # In-place RoPE on Q/K: reuse x's HBM buffer for the output.
            kwargs["input_output_aliases"] = {2: 0}

        out = pl.pallas_call(
            _rotary_kernel,
            out_shape=jax.ShapeDtypeStruct((B, T, H, D), x.dtype),
            grid_spec=pltpu.PrefetchScalarGridSpec(
                num_scalar_prefetch=0,
                grid=grid,
                in_specs=[
                    pl.BlockSpec((tT, D), lambda t, b: (t, 0)),              # cos_dup
                    pl.BlockSpec((tT, D), lambda t, b: (t, 0)),              # sin_signed
                    pl.BlockSpec((1, tT, H, D), lambda t, b: (b, t, 0, 0)),  # x
                ],
                out_specs=pl.BlockSpec((1, tT, H, D), lambda t, b: (b, t, 0, 0)),
            ),
            compiler_params=pltpu.CompilerParams(
                dimension_semantics=("parallel", "parallel"),
                vmem_limit_bytes=32 * 1024 * 1024,
            ),
            **kwargs,
        )(cos_dup, sin_signed, x)
        return out


def _reference(x, inv_freq):
    """Pure-JAX reference mirroring the PyTorch forward (fp32 cos/sin)."""
    B, T, H, D = x.shape
    t = jnp.arange(T, dtype=jnp.float32)
    freqs = jnp.outer(t, inv_freq)
    cos = jnp.cos(freqs)[None, :, None, :]
    sin = jnp.sin(freqs)[None, :, None, :]
    x1, x2 = x[..., : D // 2], x[..., D // 2:]
    y1 = x1 * cos + x2 * sin
    y2 = -x1 * sin + x2 * cos
    return jnp.concatenate([y1, y2], axis=-1).astype(x.dtype)


if __name__ == "__main__":
    key = jax.random.PRNGKey(0)

    # Main check: realistic lane-dense head_dim (D=128) exercising the
    # pltpu.roll fast path.  n_embd=1024, n_head=8 -> head_dim=128.
    B, T, n_head, n_embd = 2, 16, 8, 1024
    head_dim = n_embd // n_head
    x = jax.random.normal(key, (B, T, n_head, head_dim), dtype=jnp.float32)
    rotary = Rotary(n_embd, n_head)
    y = jax.block_until_ready(rotary(x))
    y_ref = _reference(x, rotary.inv_freq)
    assert y.shape == x.shape and y.dtype == x.dtype
    assert jnp.allclose(y, y_ref, atol=1e-5, rtol=1e-5), "mismatch (D=128 path)"

    # bf16 inputs against fp32 tables (matches PyTorch fp32 buffer semantics).
    xb = x.astype(jnp.bfloat16)
    yb = jax.block_until_ready(rotary(xb))
    yb_ref = _reference(xb, rotary.inv_freq)
    assert yb.dtype == jnp.bfloat16
    assert jnp.allclose(yb.astype(jnp.float32), yb_ref.astype(jnp.float32),
                        atol=2e-2, rtol=2e-2), "mismatch (bf16 path)"

    # Secondary check: tiny head_dim (n_embd=32, n_head=4 -> head_dim=8),
    # exercising the unaligned-D fallback path (two half stores).
    B2, T2, n_head2, n_embd2 = 2, 8, 4, 32
    head_dim2 = n_embd2 // n_head2
    x2 = jax.random.normal(jax.random.PRNGKey(1),
                           (B2, T2, n_head2, head_dim2), dtype=jnp.float32)
    rotary2 = Rotary(n_embd2, n_head2)
    y2 = jax.block_until_ready(rotary2(x2))
    y2_ref = _reference(x2, rotary2.inv_freq)
    assert y2.shape == x2.shape and y2.dtype == x2.dtype
    assert jnp.allclose(y2, y2_ref, atol=1e-5, rtol=1e-5), "mismatch (small-D path)"

    print("KERNEL_OK")
</pallas_src>

<mosaic_0001>
module attributes {stable_mosaic.version = 11 : i64} {
  func.func @_rotary_kernel(%arg0: i32, %arg1: i32, %arg2: memref<16x128xf32, #tpu.memory_space<vmem>>, %arg3: memref<16x128xf32, #tpu.memory_space<vmem>>, %arg4: memref<1x16x8x128xf32, #tpu.memory_space<vmem>>, %arg5: memref<1x16x8x128xf32, #tpu.memory_space<vmem>>) attributes {dimension_semantics = [#tpu.dimension_semantics<parallel>, #tpu.dimension_semantics<parallel>], iteration_bounds = array<i64: 1, 2>, scalar_prefetch = 0 : i64, scratch_operands = 0 : i64, tpu.core_type = #tpu.core_type<tc>, window_params = [{transform_indices = @transform_0, window_bounds = array<i64: 16, 128>}, {transform_indices = @transform_1, window_bounds = array<i64: 16, 128>}, {transform_indices = @transform_2, window_bounds = array<i64: 1, 16, 8, 128>}, {transform_indices = @transform_3, window_bounds = array<i64: 1, 16, 8, 128>}]} {
    %c0 = arith.constant 0 : index
    %c0_0 = arith.constant 0 : index
    %c0_1 = arith.constant 0 : index
    %c0_2 = arith.constant 0 : index
    %0 = vector.load %arg4[%c0, %c0_0, %c0_1, %c0_2] : memref<1x16x8x128xf32, #tpu.memory_space<vmem>>, vector<1x16x8x128xf32>
    %c0_3 = arith.constant 0 : index
    %c0_4 = arith.constant 0 : index
    %1 = vector.load %arg2[%c0_3, %c0_4] : memref<16x128xf32, #tpu.memory_space<vmem>>, vector<16x128xf32>
    %2 = vector.shape_cast %1 : vector<16x128xf32> to vector<1x16x1x128xf32>
    %c0_5 = arith.constant 0 : index
    %c0_6 = arith.constant 0 : index
    %3 = vector.load %arg3[%c0_5, %c0_6] : memref<16x128xf32, #tpu.memory_space<vmem>>, vector<16x128xf32>
    %4 = vector.shape_cast %3 : vector<16x128xf32> to vector<1x16x1x128xf32>
    %c64_i32 = arith.constant 64 : i32
    %5 = tpu.dynamic_rotate %0 by %c64_i32 dim 3 : vector<1x16x8x128xf32>, i32 -> vector<1x16x8x128xf32>
    %6 = vector.broadcast %2 : vector<1x16x1x128xf32> to vector<1x16x8x128xf32>
    %7 = arith.mulf %0, %6 : vector<1x16x8x128xf32>
    %8 = vector.broadcast %4 : vector<1x16x1x128xf32> to vector<1x16x8x128xf32>
    %9 = arith.mulf %5, %8 : vector<1x16x8x128xf32>
    %10 = arith.addf %7, %9 : vector<1x16x8x128xf32>
    %c0_7 = arith.constant 0 : index
    %c0_8 = arith.constant 0 : index
    %c0_9 = arith.constant 0 : index
    %c0_10 = arith.constant 0 : index
    %11 = vector.load %arg5[%c0_7, %c0_8, %c0_9, %c0_10] : memref<1x16x8x128xf32, #tpu.memory_space<vmem>>, vector<1x16x8x128xf32>
    tpu.vector_store %arg5[%c0_7, %c0_8, %c0_9, %c0_10], %10 {strides = array<i32>} : memref<1x16x8x128xf32, #tpu.memory_space<vmem>>, vector<1x16x8x128xf32>,
    return
  }
  func.func @transform_0(%arg0: i32, %arg1: i32) -> (i32, i32) {
    %c0_i32 = arith.constant 0 : i32
    %c0_i32_0 = arith.constant 0 : i32
    return %arg0, %c0_i32 : i32, i32
  }
  func.func @transform_1(%arg0: i32, %arg1: i32) -> (i32, i32) {
    %c0_i32 = arith.constant 0 : i32
    %c0_i32_0 = arith.constant 0 : i32
    return %arg0, %c0_i32 : i32, i32
  }
  func.func @transform_2(%arg0: i32, %arg1: i32) -> (i32, i32, i32, i32) {
    %c0_i32 = arith.constant 0 : i32
    %c0_i32_0 = arith.constant 0 : i32
    %c0_i32_1 = arith.constant 0 : i32
    return %arg1, %arg0, %c0_i32, %c0_i32_0 : i32, i32, i32, i32
  }
  func.func @transform_3(%arg0: i32, %arg1: i32) -> (i32, i32, i32, i32) {
    %c0_i32 = arith.constant 0 : i32
    %c0_i32_0 = arith.constant 0 : i32
    %c0_i32_1 = arith.constant 0 : i32
    return %arg1, %arg0, %c0_i32, %c0_i32_0 : i32, i32, i32, i32
  }
}

</mosaic_0001>

<llo_original>
// kernel: tpu_custom_call.1
$region0: #{tpu_custom_call.1}
  #allocation0 [shape = 'u32[]', space=smem, size = 0x4, offset = 0x4, fixed_abs, tag = 'smem constant byte address 0x4 - core index']
  #allocation1 [shape = 'u32[144,128]{1,0:T(1,128)}', space=vmem, size = 0x12000, scoped, tag = 'internal scratch']
  %s0 = inlined_call_operand.hbm [shape: f32[16,128], index: 0, kind: input, shape index: {}]
  %s1 = inlined_call_operand.hbm [shape: f32[16,128], index: 1, kind: input, shape index: {}]
  %s2 = inlined_call_operand.hbm [shape: f32[2,16,8,128], index: 2, kind: input, shape index: {}]
  %s3 = inlined_call_operand.hbm [shape: f32[2,16,8,128], index: 3, kind: output, shape index: {}]
  %s4 = sld [smem:[#allocation0]]
  $region57: #{tpu_custom_call.1} parent=0
    _
  %s6 = ssub.s32 1, %s4
  %s7 = scalar_select 0, %s6, %s4
  $region1: #{tpu_custom_call.1} parent=0
    #allocation2 [shape = 'u8[8192]{0}', space=vmem, size = 0x2000, scoped, tag = 'input window, operand 0, single buffered']
    #allocation3 [shape = 's32[2]{0}', space=sflag, size = 0x8, scoped, tag = 'scoped memory for tpu_custom_call.1']
    #allocation4 [shape = 's32[2]{0}', space=sflag, size = 0x8, scoped, tag = 'scoped memory for tpu_custom_call.1']
    #allocation5 [shape = 'u8[8192]{0}', space=vmem, size = 0x2000, scoped, tag = 'input window, operand 1, single buffered']
    #allocation6 [shape = 's32[1]{0}', space=sflag, size = 0x4, scoped, tag = 'scoped memory for tpu_custom_call.1']
    #allocation7 [shape = 'u8[131072]{0}', space=vmem, size = 0x20000, scoped, tag = 'input window, operand 2']
    #allocation8 [shape = 'u8[131072]{0}', space=vmem, size = 0x20000, scoped, tag = 'output window, operand 0']
    %8 = vsyncpa [#allocation3], 0
    %9 = vsyncpa [#allocation6], 0
    %10 = vsyncpa [#allocation4], 0
    %s11 = scalar_lea.sflag [#allocation4], 1
    %12 = vsyncpa %s11, 0
    loop: start=0, step=1, limit=4
    $region2: #{tpu_custom_call.1} parent=1 // loop_pre_header
      _
    $region3: #{tpu_custom_call.1} parent=1 // loop_header
      %s14 = sphi 0, %s18
      %p15 = scmp.ge.s32.totalorder %s14, 4
      %s21 = sphi 0, %s33
      %s22 = sphi 0, %s29
      %s23 = sphi 0, %s21
      %s24 = sphi 0, %s22
      %s25 = sphi 0, %s23
      %s26 = sphi 0, %s24
      %s36 = sphi 0, %s38
      %s39 = sphi 0, %s36
      %s40 = sphi 0, %s39
      %s56 = sphi 0, %s40
      %s62 = sphi 0, %s64
      %s65 = sphi 0, %s62
      %s66 = sphi 0, %s65
      %s82 = sphi 0, %s66
      %s90 = sphi 0, %s92
      %s93 = sphi 0, %s90
      %s94 = sphi 0, %s93
      %s110 = sphi 0, %s94
      %s118 = sphi 0, %s120
      %s121 = sphi 0, %s118
      %s122 = sphi 0, %s121
      %s138 = sphi 0, %s122
    $region4: #{tpu_custom_call.1} parent=1 // loop_header_branch
      %17 = sbr.rel (%p15) target = $region8
    $region5: #{tpu_custom_call.1} parent=1 // loop_body
      %s19 = ssub.s32 %s14, 1
      %s20 = ssub.s32 %s14, 2
      %s27 = sadd.s32 1, %s22
      %p28 = scmp.ge.s32.totalorder %s27, 2
      %s29 = scalar_select %p28, 0, %s27
      %s30 = sadd.s32 1, %s21
      %s31 = scalar_select %p28, %s30, %s21
      %p32 = scmp.ge.s32.totalorder %s31, 1
      %s33 = scalar_select %p32, 0, %s31
      %s34 = ssub.s32 %s21, %s33
      %p35 = scmp.eq.s32.totalorder %s34, 0
      %s37 = sadd.s32 %s36, 1
      %s38 = scalar_select %p35, %s36, %s37
      %p41 = pneg %p35
      %p42 = scmp.eq.s32.totalorder %s14, 1
      %p43 = por %p41, %p42
      %p44 = scmp.ne.s32.totalorder %s36, %s39
      %p45 = scmp.eq.s32.totalorder %s14, 0
      %p46 = por %p44, %p45
      %p47 = scmp.ne.s32.totalorder %s36, %s39
      %p48 = scmp.eq.s32.totalorder %s19, 1
      %p49 = por %p47, %p48
      %p50 = scmp.ne.s32.totalorder %s39, %s40
      %p51 = scmp.eq.s32.totalorder %s19, 0
      %p52 = por %p50, %p51
      %p53 = scmp.ne.s32.totalorder %s39, %s40
      %p54 = scmp.eq.s32.totalorder %s20, 1
      %p55 = por %p53, %p54
      %p57 = scmp.ne.s32.totalorder %s40, %s56
      %p58 = scmp.eq.s32.totalorder %s20, 0
      %p59 = por %p57, %p58
      %s60 = ssub.s32 %s21, %s33
      %p61 = scmp.eq.s32.totalorder %s60, 0
      %s63 = sadd.s32 %s62, 1
      %s64 = scalar_select %p61, %s62, %s63
      %p67 = pneg %p61
      %p68 = scmp.eq.s32.totalorder %s14, 1
      %p69 = por %p67, %p68
      %p70 = scmp.ne.s32.totalorder %s62, %s65
      %p71 = scmp.eq.s32.totalorder %s14, 0
      %p72 = por %p70, %p71
      %p73 = scmp.ne.s32.totalorder %s62, %s65
      %p74 = scmp.eq.s32.totalorder %s19, 1
      %p75 = por %p73, %p74
      %p76 = scmp.ne.s32.totalorder %s65, %s66
      %p77 = scmp.eq.s32.totalorder %s19, 0
      %p78 = por %p76, %p77
      %p79 = scmp.ne.s32.totalorder %s65, %s66
      %p80 = scmp.eq.s32.totalorder %s20, 1
      %p81 = por %p79, %p80
      %p83 = scmp.ne.s32.totalorder %s66, %s82
      %p84 = scmp.eq.s32.totalorder %s20, 0
      %p85 = por %p83, %p84
      %s86 = ssub.s32 %s22, %s29
      %s87 = ssub.s32 %s21, %s33
      %s88 = sor.u32 %s86, %s87
      %p89 = scmp.eq.s32.totalorder %s88, 0
      %s91 = sadd.s32 %s90, 1
      %s92 = scalar_select %p89, %s90, %s91
      %p95 = pneg %p89
      %p96 = scmp.eq.s32.totalorder %s14, 1
      %p97 = por %p95, %p96
      %p98 = scmp.ne.s32.totalorder %s90, %s93
      %p99 = scmp.eq.s32.totalorder %s14, 0
      %p100 = por %p98, %p99
      %p101 = scmp.ne.s32.totalorder %s90, %s93
      %p102 = scmp.eq.s32.totalorder %s19, 1
      %p103 = por %p101, %p102
      %p104 = scmp.ne.s32.totalorder %s93, %s94
      %p105 = scmp.eq.s32.totalorder %s19, 0
      %p106 = por %p104, %p105
      %p107 = scmp.ne.s32.totalorder %s93, %s94
      %p108 = scmp.eq.s32.totalorder %s20, 1
      %p109 = por %p107, %p108
      %p111 = scmp.ne.s32.totalorder %s94, %s110
      %p112 = scmp.eq.s32.totalorder %s20, 0
      %p113 = por %p111, %p112
      %s114 = ssub.s32 %s22, %s29
      %s115 = ssub.s32 %s21, %s33
      %s116 = sor.u32 %s114, %s115
      %p117 = scmp.eq.s32.totalorder %s116, 0
      %s119 = sadd.s32 %s118, 1
      %s120 = scalar_select %p117, %s118, %s119
      %p123 = pneg %p117
      %p124 = scmp.eq.s32.totalorder %s14, 1
      %p125 = por %p123, %p124
      %p126 = scmp.ne.s32.totalorder %s118, %s121
      %p127 = scmp.eq.s32.totalorder %s14, 0
      %p128 = por %p126, %p127
      %p129 = scmp.ne.s32.totalorder %s118, %s121
      %p130 = scmp.eq.s32.totalorder %s19, 1
      %p131 = por %p129, %p130
      %p132 = scmp.ne.s32.totalorder %s121, %s122
      %p133 = scmp.eq.s32.totalorder %s19, 0
      %p134 = por %p132, %p133
      %p135 = scmp.ne.s32.totalorder %s121, %s122
      %p136 = scmp.eq.s32.totalorder %s20, 1
      %p137 = por %p135, %p136
      %p139 = scmp.ne.s32.totalorder %s122, %s138
      %p140 = scmp.eq.s32.totalorder %s20, 0
      %p141 = por %p139, %p140
      %p142 = scmp.le.s32.totalorder 1, %s14
      %p143 = scmp.lt.s32.totalorder %s14, 3
      %p144 = pnand %p142, %p143
      %p145 = pneg %p144
      // Predicated region
      $region9: #{tpu_custom_call.1} parent=5 // pred_check
        _
      $region10: #{tpu_custom_call.1} parent=5 // pred_check_branch
        %147 = sbr.rel (%p144) target = $region12
      $region11: #{tpu_custom_call.1} parent=5 // pred_region
        %s148 = ssub.s32 %s14, 1
        // Predicated region
        $region13: #{tpu_custom_call.1} parent=11 // pred_check
          %p149 = pneg %p52
        $region14: #{tpu_custom_call.1} parent=11 // pred_check_branch
          %151 = sbr.rel (%p149) target = $region16
        $region15: #{tpu_custom_call.1} parent=11 // pred_region
          %s152 = smul.u32 2, %s23
          %s154 = ssub.s32 256, 256
          %155 = vsyncadd [#allocation3], %s154
          %s156 = smul.addr %s152, 128
          %s157 = scalar_lea.hbm %s0, %s156
          %s158 = sshll.u32 [#allocation2], 4
          %s159 = int_to_ptr.vmem [resolvable:$true] %s158
          %164 = dma.hbm_to_vmem [thread:$0]  %s157, 256, %s159, [#allocation3], 128, 128, 8
        $region16: #{tpu_custom_call.1} parent=11 // pred_fallthru
          _
        // Predicated region
        $region17: #{tpu_custom_call.1} parent=11 // pred_check
          %p165 = pneg %p78
        $region18: #{tpu_custom_call.1} parent=11 // pred_check_branch
          %167 = sbr.rel (%p165) target = $region20
        $region19: #{tpu_custom_call.1} parent=11 // pred_region
          %s168 = smul.u32 2, %s23
          %s170 = ssub.s32 256, 256
          %171 = vsyncadd [#allocation6], %s170
          %s172 = smul.addr %s168, 128
          %s173 = scalar_lea.hbm %s1, %s172
          %s174 = sshll.u32 [#allocation5], 4
          %s175 = int_to_ptr.vmem [resolvable:$true] %s174
          %180 = dma.hbm_to_vmem [thread:$0]  %s173, 256, %s175, [#allocation6], 128, 128, 8
        $region20: #{tpu_custom_call.1} parent=11 // pred_fallthru
          _
      $region12: #{tpu_custom_call.1} parent=5 // pred_fallthru
        _
      %p181 = scmp.lt.s32.totalorder %s14, 2
      // Predicated region
      $region21: #{tpu_custom_call.1} parent=5 // pred_check
        %p182 = pneg %p181
      $region22: #{tpu_custom_call.1} parent=5 // pred_check_branch
        %184 = sbr.rel (%p182) target = $region24
      $region23: #{tpu_custom_call.1} parent=5 // pred_region
        // Predicated region
        $region25: #{tpu_custom_call.1} parent=23 // pred_check
          %p185 = pneg %p100
        $region26: #{tpu_custom_call.1} parent=23 // pred_check_branch
          %187 = sbr.rel (%p185) target = $region28
        $region27: #{tpu_custom_call.1} parent=23 // pred_region
          %s188 = sand.u32 %s14, 1
          %s189 = scalar_lea.sflag [#allocation3], %s188
          %s190 = sand.u32 %s90, 1
          %s191 = smul.addr %s190, 128
          %s192 = scalar_lea.vmem [#allocation7], %s191
          %s193 = smul.u32 16, %s21
          %s195 = ssub.s32 2048, 2048
          %196 = vsyncadd %s189, %s195
          %s197 = smul.addr %s22, 16
          %s198 = sadd.s32 %s193, %s197
          %s199 = smul.addr %s198, 128
          %s200 = scalar_lea.hbm %s2, %s199
          %s201 = sshll.u32 %s192, 4
          %s202 = int_to_ptr.vmem [resolvable:$true] %s201
          %207 = dma.hbm_to_vmem [thread:$0]  %s200, 2048, %s202, %s189, 128, 128, 8
        $region28: #{tpu_custom_call.1} parent=23 // pred_fallthru
          _
      $region24: #{tpu_custom_call.1} parent=5 // pred_fallthru
        _
      %p208 = scmp.le.s32.totalorder 1, %s14
      %p209 = scmp.lt.s32.totalorder %s14, 3
      %p210 = pnand %p208, %p209
      %p211 = pneg %p210
      // Predicated region
      $region29: #{tpu_custom_call.1} parent=5 // pred_check
        _
      $region30: #{tpu_custom_call.1} parent=5 // pred_check_branch
        %213 = sbr.rel (%p210) target = $region32
      $region31: #{tpu_custom_call.1} parent=5 // pred_region
        %s214 = ssub.s32 %s14, 1
        // Predicated region
        $region33: #{tpu_custom_call.1} parent=31 // pred_check
          %p215 = pneg %p52
        $region34: #{tpu_custom_call.1} parent=31 // pred_check_branch
          %217 = sbr.rel (%p215) target = $region36
        $region35: #{tpu_custom_call.1} parent=31 // pred_region
          %218 = dma.done [#allocation3], 256
        $region36: #{tpu_custom_call.1} parent=31 // pred_fallthru
          _
        // Predicated region
        $region37: #{tpu_custom_call.1} parent=31 // pred_check
          %p219 = pneg %p78
        $region38: #{tpu_custom_call.1} parent=31 // pred_check_branch
          %221 = sbr.rel (%p219) target = $region40
        $region39: #{tpu_custom_call.1} parent=31 // pred_region
          %222 = dma.done [#allocation6], 256
        $region40: #{tpu_custom_call.1} parent=31 // pred_fallthru
          _
        %s223 = sand.u32 %s19, 1
        %s224 = scalar_lea.sflag [#allocation3], %s223
        %s225 = sand.u32 %s93, 1
        %s226 = smul.addr %s225, 128
        %s227 = scalar_lea.vmem [#allocation7], %s226
        // Predicated region
        $region41: #{tpu_custom_call.1} parent=31 // pred_check
          %p228 = pneg %p106
        $region42: #{tpu_custom_call.1} parent=31 // pred_check_branch
          %230 = sbr.rel (%p228) target = $region44
        $region43: #{tpu_custom_call.1} parent=31 // pred_region
          %231 = dma.done %s224, 2048
        $region44: #{tpu_custom_call.1} parent=31 // pred_fallthru
          _
        %p232 = pneg %p52
        %p233 = pneg %p49
        %p234 = pneg %p78
        %p235 = pneg %p75
        %s236 = sand.u32 %s19, 1
        %s237 = scalar_lea.sflag [#allocation3], %s236
        %s238 = sand.u32 %s93, 1
        %s239 = smul.addr %s238, 128
        %s240 = scalar_lea.vmem [#allocation7], %s239
        %p241 = pneg %p106
        %p242 = pneg %p103
        %p243 = pneg %p134
        %p244 = pneg %p131
        %s245 = sand.u32 %s121, 1
        %s246 = scalar_lea.sflag [#allocation4], %s245
        %s247 = sand.u32 %s121, 1
        %s248 = smul.addr %s247, 128
        %s249 = scalar_lea.vmem [#allocation8], %s248
        %s250 = smul.u32 2, %s23
        %s251 = smul.u32 2, %s23
        %s252 = smul.u32 16, %s23
        %s253 = smul.u32 16, %s23
        %v254 = vld [vmem:[%s227] sm:$0xff]
        %v255 = vld [vmem:[%s227 + $0x8] sm:$0xff]
        %v256 = vld [vmem:[%s227 + $0x10] sm:$0xff]
        %v257 = vld [vmem:[%s227 + $0x18] sm:$0xff]
        %v258 = vld [vmem:[%s227 + $0x20] sm:$0xff]
        %v259 = vld [vmem:[%s227 + $0x28] sm:$0xff]
        %v260 = vld [vmem:[%s227 + $0x30] sm:$0xff]
        %v261 = vld [vmem:[%s227 + $0x38] sm:$0xff]
        %v262 = vld [vmem:[%s227 + $0x40] sm:$0xff]
        %v263 = vld [vmem:[%s227 + $0x48] sm:$0xff]
        %v264 = vld [vmem:[%s227 + $0x50] sm:$0xff]
        %v265 = vld [vmem:[%s227 + $0x58] sm:$0xff]
        %v266 = vld [vmem:[%s227 + $0x60] sm:$0xff]
        %v267 = vld [vmem:[%s227 + $0x68] sm:$0xff]
        %v268 = vld [vmem:[%s227 + $0x70] sm:$0xff]
        %v269 = vld [vmem:[%s227 + $0x78] sm:$0xff]
        %v270 = vld [vmem:[#allocation2] sm:$0xff]
        %v271 = vld [vmem:[#allocation2 + $0x8] sm:$0xff]
        %v274 = vcombine.high %v270, %v270
        %v276 = vunpack.c.l.s4 1966171168
        %v277 = vunpack.c.0.s8 %v276
        %v278 = vlaneseq
        %v279 = vshrl.u32 %v278, 7
        %v280 = vsub.s32 %v277, %v279
        %v281 = vrot.slane %v270, %v280
        %v283 = vunpack.c.l.s4 1966171168
        %v284 = vunpack.c.0.s8 %v283
        %v285 = vlaneseq
        %v286 = vshrl.u32 %v285, 7
        %v287 = vsub.s32 %v284, %v286
        %v288 = vrot.slane %v274, %v287
        %v289 = vcombine.high %v281, %v281
        %v290 = vcombine.high %v288, %v288
        %v292 = vunpack.c.l.s4 1966171168
        %v293 = vunpack.c.0.s8 %v292
        %v294 = vlaneseq
        %v295 = vshrl.u32 %v294, 7
        %v296 = vsub.s32 %v293, %v295
        %v297 = vrot.slane %v281, %v296
        %v299 = vunpack.c.l.s4 1966171168
        %v300 = vunpack.c.0.s8 %v299
        %v301 = vlaneseq
        %v302 = vshrl.u32 %v301, 7
        %v303 = vsub.s32 %v300, %v302
        %v304 = vrot.slane %v288, %v303
        %v306 = vunpack.c.l.s4 1966171168
        %v307 = vunpack.c.0.s8 %v306
        %v308 = vlaneseq
        %v309 = vshrl.u32 %v308, 7
        %v310 = vsub.s32 %v307, %v309
        %v311 = vrot.slane %v289, %v310
        %v313 = vunpack.c.l.s4 1966171168
        %v314 = vunpack.c.0.s8 %v313
        %v315 = vlaneseq
        %v316 = vshrl.u32 %v315, 7
        %v317 = vsub.s32 %v314, %v316
        %v318 = vrot.slane %v290, %v317
        %v319 = vcombine.high %v297, %v297
        %v320 = vcombine.high %v304, %v304
        %v321 = vcombine.high %v311, %v311
        %v322 = vcombine.high %v318, %v318
        %v323 = vcombine.high %v271, %v271
        %v325 = vunpack.c.l.s4 1966171168
        %v326 = vunpack.c.0.s8 %v325
        %v327 = vlaneseq
        %v328 = vshrl.u32 %v327, 7
        %v329 = vsub.s32 %v326, %v328
        %v330 = vrot.slane %v271, %v329
        %v332 = vunpack.c.l.s4 1966171168
        %v333 = vunpack.c.0.s8 %v332
        %v334 = vlaneseq
        %v335 = vshrl.u32 %v334, 7
        %v336 = vsub.s32 %v333, %v335
        %v337 = vrot.slane %v323, %v336
        %v338 = vcombine.high %v330, %v330
        %v339 = vcombine.high %v337, %v337
        %v341 = vunpack.c.l.s4 1966171168
        %v342 = vunpack.c.0.s8 %v341
        %v343 = vlaneseq
        %v344 = vshrl.u32 %v343, 7
        %v345 = vsub.s32 %v342, %v344
        %v346 = vrot.slane %v330, %v345
        %v348 = vunpack.c.l.s4 1966171168
        %v349 = vunpack.c.0.s8 %v348
        %v350 = vlaneseq
        %v351 = vshrl.u32 %v350, 7
        %v352 = vsub.s32 %v349, %v351
        %v353 = vrot.slane %v337, %v352
        %v355 = vunpack.c.l.s4 1966171168
        %v356 = vunpack.c.0.s8 %v355
        %v357 = vlaneseq
        %v358 = vshrl.u32 %v357, 7
        %v359 = vsub.s32 %v356, %v358
        %v360 = vrot.slane %v338, %v359
        %v362 = vunpack.c.l.s4 1966171168
        %v363 = vunpack.c.0.s8 %v362
        %v364 = vlaneseq
        %v365 = vshrl.u32 %v364, 7
        %v366 = vsub.s32 %v363, %v365
        %v367 = vrot.slane %v339, %v366
        %v368 = vcombine.high %v346, %v346
        %v369 = vcombine.high %v353, %v353
        %v370 = vcombine.high %v360, %v360
        %v371 = vcombine.high %v367, %v367
        %v372 = vld [vmem:[#allocation5] sm:$0xff]
        %v373 = vld [vmem:[#allocation5 + $0x8] sm:$0xff]
        %v376 = vcombine.high %v372, %v372
        %v378 = vunpack.c.l.s4 1966171168
        %v379 = vunpack.c.0.s8 %v378
        %v380 = vlaneseq
        %v381 = vshrl.u32 %v380, 7
        %v382 = vsub.s32 %v379, %v381
        %v383 = vrot.slane %v372, %v382
        %v385 = vunpack.c.l.s4 1966171168
        %v386 = vunpack.c.0.s8 %v385
        %v387 = vlaneseq
        %v388 = vshrl.u32 %v387, 7
        %v389 = vsub.s32 %v386, %v388
        %v390 = vrot.slane %v376, %v389
        %v391 = vcombine.high %v383, %v383
        %v392 = vcombine.high %v390, %v390
        %v394 = vunpack.c.l.s4 1966171168
        %v395 = vunpack.c.0.s8 %v394
        %v396 = vlaneseq
        %v397 = vshrl.u32 %v396, 7
        %v398 = vsub.s32 %v395, %v397
        %v399 = vrot.slane %v383, %v398
        %v401 = vunpack.c.l.s4 1966171168
        %v402 = vunpack.c.0.s8 %v401
        %v403 = vlaneseq
        %v404 = vshrl.u32 %v403, 7
        %v405 = vsub.s32 %v402, %v404
        %v406 = vrot.slane %v390, %v405
        %v408 = vunpack.c.l.s4 1966171168
        %v409 = vunpack.c.0.s8 %v408
        %v410 = vlaneseq
        %v411 = vshrl.u32 %v410, 7
        %v412 = vsub.s32 %v409, %v411
        %v413 = vrot.slane %v391, %v412
        %v415 = vunpack.c.l.s4 1966171168
        %v416 = vunpack.c.0.s8 %v415
        %v417 = vlaneseq
        %v418 = vshrl.u32 %v417, 7
        %v419 = vsub.s32 %v416, %v418
        %v420 = vrot.slane %v392, %v419
        %v421 = vcombine.high %v399, %v399
        %v422 = vcombine.high %v406, %v406
        %v423 = vcombine.high %v413, %v413
        %v424 = vcombine.high %v420, %v420
        %v425 = vcombine.high %v373, %v373
        %v427 = vunpack.c.l.s4 1966171168
        %v428 = vunpack.c.0.s8 %v427
        %v429 = vlaneseq
        %v430 = vshrl.u32 %v429, 7
        %v431 = vsub.s32 %v428, %v430
        %v432 = vrot.slane %v373, %v431
        %v434 = vunpack.c.l.s4 1966171168
        %v435 = vunpack.c.0.s8 %v434
        %v436 = vlaneseq
        %v437 = vshrl.u32 %v436, 7
        %v438 = vsub.s32 %v435, %v437
        %v439 = vrot.slane %v425, %v438
        %v440 = vcombine.high %v432, %v432
        %v441 = vcombine.high %v439, %v439
        %v443 = vunpack.c.l.s4 1966171168
        %v444 = vunpack.c.0.s8 %v443
        %v445 = vlaneseq
        %v446 = vshrl.u32 %v445, 7
        %v447 = vsub.s32 %v444, %v446
        %v448 = vrot.slane %v432, %v447
        %v450 = vunpack.c.l.s4 1966171168
        %v451 = vunpack.c.0.s8 %v450
        %v452 = vlaneseq
        %v453 = vshrl.u32 %v452, 7
        %v454 = vsub.s32 %v451, %v453
        %v455 = vrot.slane %v439, %v454
        %v457 = vunpack.c.l.s4 1966171168
        %v458 = vunpack.c.0.s8 %v457
        %v459 = vlaneseq
        %v460 = vshrl.u32 %v459, 7
        %v461 = vsub.s32 %v458, %v460
        %v462 = vrot.slane %v440, %v461
        %v464 = vunpack.c.l.s4 1966171168
        %v465 = vunpack.c.0.s8 %v464
        %v466 = vlaneseq
        %v467 = vshrl.u32 %v466, 7
        %v468 = vsub.s32 %v465, %v467
        %v469 = vrot.slane %v441, %v468
        %v470 = vcombine.high %v448, %v448
        %v471 = vcombine.high %v455, %v455
        %v472 = vcombine.high %v462, %v462
        %v473 = vcombine.high %v469, %v469
        %474 = vrot.lane.b32.xlu0 %v254, 64
        %v475 = vpop.permute.xlu0 %474
        %476 = vrot.lane.b32.xlu0 %v255, 64
        %v477 = vpop.permute.xlu0 %476
        %478 = vrot.lane.b32.xlu0 %v256, 64
        %v479 = vpop.permute.xlu0 %478
        %480 = vrot.lane.b32.xlu0 %v257, 64
        %v481 = vpop.permute.xlu0 %480
        %482 = vrot.lane.b32.xlu0 %v258, 64
        %v483 = vpop.permute.xlu0 %482
        %484 = vrot.lane.b32.xlu0 %v259, 64
        %v485 = vpop.permute.xlu0 %484
        %486 = vrot.lane.b32.xlu0 %v260, 64
        %v487 = vpop.permute.xlu0 %486
        %488 = vrot.lane.b32.xlu0 %v261, 64
        %v489 = vpop.permute.xlu0 %488
        %490 = vrot.lane.b32.xlu0 %v262, 64
        %v491 = vpop.permute.xlu0 %490
        %492 = vrot.lane.b32.xlu0 %v263, 64
        %v493 = vpop.permute.xlu0 %492
        %494 = vrot.lane.b32.xlu0 %v264, 64
        %v495 = vpop.permute.xlu0 %494
        %496 = vrot.lane.b32.xlu0 %v265, 64
        %v497 = vpop.permute.xlu0 %496
        %498 = vrot.lane.b32.xlu0 %v266, 64
        %v499 = vpop.permute.xlu0 %498
        %500 = vrot.lane.b32.xlu0 %v267, 64
        %v501 = vpop.permute.xlu0 %500
        %502 = vrot.lane.b32.xlu0 %v268, 64
        %v503 = vpop.permute.xlu0 %502
        %504 = vrot.lane.b32.xlu0 %v269, 64
        %v505 = vpop.permute.xlu0 %504
        %v506 = vlaneseq
        %v507 = vshrl.u32 %v506, 7
        %v508 = vsub.s32 0, %v507
        %v509 = vrot.slane %v297, %v508
        %v510 = vlaneseq
        %v511 = vshrl.u32 %v510, 7
        %v512 = vsub.s32 0, %v511
        %v513 = vrot.slane %v311, %v512
        %v514 = vlaneseq
        %v515 = vshrl.u32 %v514, 7
        %v516 = vsub.s32 0, %v515
        %v517 = vrot.slane %v319, %v516
        %v518 = vlaneseq
        %v519 = vshrl.u32 %v518, 7
        %v520 = vsub.s32 0, %v519
        %v521 = vrot.slane %v321, %v520
        %v522 = vlaneseq
        %v523 = vshrl.u32 %v522, 7
        %v524 = vsub.s32 0, %v523
        %v525 = vrot.slane %v304, %v524
        %v526 = vlaneseq
        %v527 = vshrl.u32 %v526, 7
        %v528 = vsub.s32 0, %v527
        %v529 = vrot.slane %v318, %v528
        %v530 = vlaneseq
        %v531 = vshrl.u32 %v530, 7
        %v532 = vsub.s32 0, %v531
        %v533 = vrot.slane %v320, %v532
        %v534 = vlaneseq
        %v535 = vshrl.u32 %v534, 7
        %v536 = vsub.s32 0, %v535
        %v537 = vrot.slane %v322, %v536
        %v538 = vlaneseq
        %v539 = vshrl.u32 %v538, 7
        %v540 = vsub.s32 0, %v539
        %v541 = vrot.slane %v346, %v540
        %v542 = vlaneseq
        %v543 = vshrl.u32 %v542, 7
        %v544 = vsub.s32 0, %v543
        %v545 = vrot.slane %v360, %v544
        %v546 = vlaneseq
        %v547 = vshrl.u32 %v546, 7
        %v548 = vsub.s32 0, %v547
        %v549 = vrot.slane %v368, %v548
        %v550 = vlaneseq
        %v551 = vshrl.u32 %v550, 7
        %v552 = vsub.s32 0, %v551
        %v553 = vrot.slane %v370, %v552
        %v554 = vlaneseq
        %v555 = vshrl.u32 %v554, 7
        %v556 = vsub.s32 0, %v555
        %v557 = vrot.slane %v353, %v556
        %v558 = vlaneseq
        %v559 = vshrl.u32 %v558, 7
        %v560 = vsub.s32 0, %v559
        %v561 = vrot.slane %v367, %v560
        %v562 = vlaneseq
        %v563 = vshrl.u32 %v562, 7
        %v564 = vsub.s32 0, %v563
        %v565 = vrot.slane %v369, %v564
        %v566 = vlaneseq
        %v567 = vshrl.u32 %v566, 7
        %v568 = vsub.s32 0, %v567
        %v569 = vrot.slane %v371, %v568
        %v586 = vmul.f32 %v254, %v509
        %v587 = vmul.f32 %v255, %v513
        %v588 = vmul.f32 %v256, %v517
        %v589 = vmul.f32 %v257, %v521
        %v590 = vmul.f32 %v258, %v525
        %v591 = vmul.f32 %v259, %v529
        %v592 = vmul.f32 %v260, %v533
        %v593 = vmul.f32 %v261, %v537
        %v594 = vmul.f32 %v262, %v541
        %v595 = vmul.f32 %v263, %v545
        %v596 = vmul.f32 %v264, %v549
        %v597 = vmul.f32 %v265, %v553
        %v598 = vmul.f32 %v266, %v557
        %v599 = vmul.f32 %v267, %v561
        %v600 = vmul.f32 %v268, %v565
        %v601 = vmul.f32 %v269, %v569
        %v602 = vlaneseq
        %v603 = vshrl.u32 %v602, 7
        %v604 = vsub.s32 0, %v603
        %v605 = vrot.slane %v399, %v604
        %v606 = vlaneseq
        %v607 = vshrl.u32 %v606, 7
        %v608 = vsub.s32 0, %v607
        %v609 = vrot.slane %v413, %v608
        %v610 = vlaneseq
        %v611 = vshrl.u32 %v610, 7
        %v612 = vsub.s32 0, %v611
        %v613 = vrot.slane %v421, %v612
        %v614 = vlaneseq
        %v615 = vshrl.u32 %v614, 7
        %v616 = vsub.s32 0, %v615
        %v617 = vrot.slane %v423, %v616
        %v618 = vlaneseq
        %v619 = vshrl.u32 %v618, 7
        %v620 = vsub.s32 0, %v619
        %v621 = vrot.slane %v406, %v620
        %v622 = vlaneseq
        %v623 = vshrl.u32 %v622, 7
        %v624 = vsub.s32 0, %v623
        %v625 = vrot.slane %v420, %v624
        %v626 = vlaneseq
        %v627 = vshrl.u32 %v626, 7
        %v628 = vsub.s32 0, %v627
        %v629 = vrot.slane %v422, %v628
        %v630 = vlaneseq
        %v631 = vshrl.u32 %v630, 7
        %v632 = vsub.s32 0, %v631
        %v633 = vrot.slane %v424, %v632
        %v634 = vlaneseq
        %v635 = vshrl.u32 %v634, 7
        %v636 = vsub.s32 0, %v635
        %v637 = vrot.slane %v448, %v636
        %v638 = vlaneseq
        %v639 = vshrl.u32 %v638, 7
        %v640 = vsub.s32 0, %v639
        %v641 = vrot.slane %v462, %v640
        %v642 = vlaneseq
        %v643 = vshrl.u32 %v642, 7
        %v644 = vsub.s32 0, %v643
        %v645 = vrot.slane %v470, %v644
        %v646 = vlaneseq
        %v647 = vshrl.u32 %v646, 7
        %v648 = vsub.s32 0, %v647
        %v649 = vrot.slane %v472, %v648
        %v650 = vlaneseq
        %v651 = vshrl.u32 %v650, 7
        %v652 = vsub.s32 0, %v651
        %v653 = vrot.slane %v455, %v652
        %v654 = vlaneseq
        %v655 = vshrl.u32 %v654, 7
        %v656 = vsub.s32 0, %v655
        %v657 = vrot.slane %v469, %v656
        %v658 = vlaneseq
        %v659 = vshrl.u32 %v658, 7
        %v660 = vsub.s32 0, %v659
        %v661 = vrot.slane %v471, %v660
        %v662 = vlaneseq
        %v663 = vshrl.u32 %v662, 7
        %v664 = vsub.s32 0, %v663
        %v665 = vrot.slane %v473, %v664
        %v682 = vmul.f32 %v475, %v605
        %v683 = vmul.f32 %v477, %v609
        %v684 = vmul.f32 %v479, %v613
        %v685 = vmul.f32 %v481, %v617
        %v686 = vmul.f32 %v483, %v621
        %v687 = vmul.f32 %v485, %v625
        %v688 = vmul.f32 %v487, %v629
        %v689 = vmul.f32 %v489, %v633
        %v690 = vmul.f32 %v491, %v637
        %v691 = vmul.f32 %v493, %v641
        %v692 = vmul.f32 %v495, %v645
        %v693 = vmul.f32 %v497, %v649
        %v694 = vmul.f32 %v499, %v653
        %v695 = vmul.f32 %v501, %v657
        %v696 = vmul.f32 %v503, %v661
        %v697 = vmul.f32 %v505, %v665
        %v698 = vadd.f32 %v586, %v682
        %v699 = vadd.f32 %v587, %v683
        %v700 = vadd.f32 %v588, %v684
        %v701 = vadd.f32 %v589, %v685
        %v702 = vadd.f32 %v590, %v686
        %v703 = vadd.f32 %v591, %v687
        %v704 = vadd.f32 %v592, %v688
        %v705 = vadd.f32 %v593, %v689
        %v706 = vadd.f32 %v594, %v690
        %v707 = vadd.f32 %v595, %v691
        %v708 = vadd.f32 %v596, %v692
        %v709 = vadd.f32 %v597, %v693
        %v710 = vadd.f32 %v598, %v694
        %v711 = vadd.f32 %v599, %v695
        %v712 = vadd.f32 %v600, %v696
        %v713 = vadd.f32 %v601, %v697
        %714 = vst [vmem:[%s249] sm:$0xff] %v698
        %715 = vst [vmem:[%s249 + $0x8] sm:$0xff] %v699
        %716 = vst [vmem:[%s249 + $0x10] sm:$0xff] %v700
        %717 = vst [vmem:[%s249 + $0x18] sm:$0xff] %v701
        %718 = vst [vmem:[%s249 + $0x20] sm:$0xff] %v702
        %719 = vst [vmem:[%s249 + $0x28] sm:$0xff] %v703
        %720 = vst [vmem:[%s249 + $0x30] sm:$0xff] %v704
        %721 = vst [vmem:[%s249 + $0x38] sm:$0xff] %v705
        %722 = vst [vmem:[%s249 + $0x40] sm:$0xff] %v706
        %723 = vst [vmem:[%s249 + $0x48] sm:$0xff] %v707
        %724 = vst [vmem:[%s249 + $0x50] sm:$0xff] %v708
        %725 = vst [vmem:[%s249 + $0x58] sm:$0xff] %v709
        %726 = vst [vmem:[%s249 + $0x60] sm:$0xff] %v710
        %727 = vst [vmem:[%s249 + $0x68] sm:$0xff] %v711
        %728 = vst [vmem:[%s249 + $0x70] sm:$0xff] %v712
        %729 = vst [vmem:[%s249 + $0x78] sm:$0xff] %v713
        %s730 = sand.u32 %s121, 1
        %s731 = scalar_lea.sflag [#allocation4], %s730
        %s732 = sand.u32 %s121, 1
        %s733 = smul.addr %s732, 128
        %s734 = scalar_lea.vmem [#allocation8], %s733
        // Predicated region
        $region45: #{tpu_custom_call.1} parent=31 // pred_check
          %p735 = pneg %p131
        $region46: #{tpu_custom_call.1} parent=31 // pred_check_branch
          %737 = sbr.rel (%p735) target = $region48
        $region47: #{tpu_custom_call.1} parent=31 // pred_region
          %s738 = smul.u32 16, %s23
          %s740 = ssub.s32 2048, 2048
          %741 = vsyncadd %s731, %s740
          %s742 = smul.addr %s24, 16
          %s743 = sadd.s32 %s738, %s742
          %s744 = smul.addr %s743, 128
          %s745 = scalar_lea.hbm %s3, %s744
          %s746 = sshll.u32 %s734, 4
          %s747 = int_to_ptr.vmem [resolvable:$true] %s746
          %752 = dma.vmem_to_hbm [thread:$0]  %s747, 2048, %s745, %s731, 128, 128, 8
        $region48: #{tpu_custom_call.1} parent=31 // pred_fallthru
          _
      $region32: #{tpu_custom_call.1} parent=5 // pred_fallthru
        _
      %p753 = scmp.le.s32.totalorder 2, %s14
      // Predicated region
      $region49: #{tpu_custom_call.1} parent=5 // pred_check
        %p754 = pneg %p753
      $region50: #{tpu_custom_call.1} parent=5 // pred_check_branch
        %756 = sbr.rel (%p754) target = $region52
      $region51: #{tpu_custom_call.1} parent=5 // pred_region
        %s757 = ssub.s32 %s14, 2
        // Predicated region
        $region53: #{tpu_custom_call.1} parent=51 // pred_check
          %p758 = pneg %p137
        $region54: #{tpu_custom_call.1} parent=51 // pred_check_branch
          %760 = sbr.rel (%p758) target = $region56
        $region55: #{tpu_custom_call.1} parent=51 // pred_region
          %s761 = sand.u32 %s122, 1
          %s762 = scalar_lea.sflag [#allocation4], %s761
          %s763 = sand.u32 %s122, 1
          %s764 = smul.addr %s763, 128
          %s765 = scalar_lea.vmem [#allocation8], %s764
          %766 = dma.done %s762, 2048
        $region56: #{tpu_custom_call.1} parent=51 // pred_fallthru
          _
      $region52: #{tpu_custom_call.1} parent=5 // pred_fallthru
        _
    $region6: #{tpu_custom_call.1} parent=1 // loop_footer
      %s18 = sadd.s32 1, %s14
    $region7: #{tpu_custom_call.1} parent=1 // loop_footer_branch
      %13 = sbr.rel target = $region3
    $region8: #{tpu_custom_call.1} parent=1 // loop_exit
      _
    %767 = vsyncpa [#allocation3], 1
    %s768 = scalar_lea.sflag [#allocation3], 1
    %769 = vsyncpa %s768, 1
    %770 = vsyncpa [#allocation6], 1
    %771 = vsyncpa [#allocation4], 1
    %s772 = scalar_lea.sflag [#allocation4], 1
    %773 = vsyncpa %s772, 1

</llo_original>
